<compile_context>
chip_gen: v7x
topology: tpu7x:2x2x1
jax: 0.10.0
libtpu: 0.0.40
codegen_flags: <defaults>
</compile_context>

<pallas_src>
import functools

import jax
import jax.numpy as jnp
from jax.experimental import pallas as pl
from jax.experimental.pallas import tpu as pltpu


MAT_DIFF_LOSS_SCALE = 0.001  # matches PointNetLoss(mat_diff_loss_scale=0.001)


def _round_up(x, m):
    return ((x + m - 1) // m) * m


def _pointnet_loss_kernel(pred_ref, target_ref, trans_ref, out_ref, acc_ref,
                          *, batch_size, block_b, scale):
    step = pl.program_id(0)

    @pl.when(step == 0)
    def _init():
        acc_ref[0] = jnp.float32(0.0)
        acc_ref[1] = jnp.float32(0.0)

    pred = pred_ref[...]          # (bb, C)
    target = target_ref[...]      # (bb, 1) int32
    bb, C = pred.shape
    d = trans_ref.shape[1]

    # ---- validity mask for the (possibly ragged) last block ---------------------
    row_ids = jax.lax.broadcasted_iota(jnp.int32, (bb, 1), dimension=0)
    valid = (step * block_b + row_ids) < batch_size            # (bb, 1) bool

    # ---- NLL partial: sum_b pred[b, target[b]]  (gather via compare + select) ----
    class_ids = jax.lax.broadcasted_iota(jnp.int32, (bb, C), dimension=1)
    sel_mask = jnp.logical_and(class_ids == target, valid)     # (bb, C)
    selected = jnp.where(sel_mask, pred.astype(jnp.float32), jnp.float32(0.0))
    nll_partial = jnp.sum(selected)                            # scalar f32

    # ---- Frobenius partial: sum_b ||T_b T_b^T - I||_F ---------------------------
    # ||G - I||_F^2 = sum(G*G) - 2*trace(G) + d, and trace(T T^T) = sum(T*T).
    trans = trans_ref[...]                                     # (bb, d, d)
    gram = jnp.einsum('bij,bkj->bik', trans, trans,
                      preferred_element_type=jnp.float32)      # (bb, d, d) f32
    g2 = jnp.sum(jnp.sum(gram * gram, axis=2), axis=1, keepdims=True)   # (bb, 1)
    tf = trans.astype(jnp.float32)
    t2 = jnp.sum(jnp.sum(tf * tf, axis=2), axis=1, keepdims=True)       # (bb, 1)
    fro_sq = g2 - 2.0 * t2 + jnp.float32(d)                    # (bb, 1)
    fro = jnp.sqrt(jnp.maximum(fro_sq, jnp.float32(0.0)))      # guard fp-noise negatives
    fro = jnp.where(valid, fro, jnp.float32(0.0))              # zero out padded rows
    fro_partial = jnp.sum(fro)                                 # scalar f32

    acc_ref[0] = acc_ref[0] + nll_partial
    acc_ref[1] = acc_ref[1] + fro_partial

    @pl.when(step == pl.num_programs(0) - 1)
    def _finalize():
        inv_b = jnp.float32(1.0 / batch_size)
        # loss = -sum_selected/B + scale * sum_fro/B
        out_ref[0, 0] = (jnp.float32(scale) * acc_ref[1] - acc_ref[0]) * inv_b


def pointnet_loss(pred, target, trans_feat,
                  mat_diff_loss_scale=MAT_DIFF_LOSS_SCALE, block_b=None):
    """pred: (B, C) log-probs; target: (B,) int; trans_feat: (B, d, d)."""
    B, C = pred.shape
    d = trans_feat.shape[1]
    target2d = target.astype(jnp.int32).reshape(B, 1)

    if block_b is None:
        # Pick the largest batch block whose working set (double-buffered inputs +
        # f32 Gram temporary) stays well under the smallest default scoped-VMEM
        # limit (v5e: 16 MiB).  Rows ~= 16*d^2 + 16*C bytes each.
        budget = 10 * 1024 * 1024
        per_row = 16 * d * d + 16 * C + 16
        cap = max(8, min(512, (budget // per_row) // 8 * 8))
        block_b = B if B <= cap else cap
    else:
        # Honour a caller-provided block, keeping the sublane divisibility rule.
        block_b = B if B <= block_b else _round_up(block_b, 8)

    num_blocks = pl.cdiv(B, block_b)
    b_work = num_blocks * block_b

    kernel = functools.partial(_pointnet_loss_kernel,
                               batch_size=B,
                               block_b=block_b,
                               scale=float(mat_diff_loss_scale))

    bytes_accessed = int(pred.size * pred.dtype.itemsize
                         + target2d.size * 4
                         + trans_feat.size * trans_feat.dtype.itemsize
                         + 4)

    out = pl.pallas_call(
        kernel,
        out_shape=jax.ShapeDtypeStruct((1, 1), jnp.float32),
        grid_spec=pltpu.PrefetchScalarGridSpec(
            num_scalar_prefetch=0,
            grid=(num_blocks,),
            in_specs=[
                pl.BlockSpec((block_b, C), lambda i: (i, 0)),        # pred
                pl.BlockSpec((block_b, 1), lambda i: (i, 0)),        # target
                pl.BlockSpec((block_b, d, d), lambda i: (i, 0, 0)),  # trans_feat
            ],
            out_specs=pl.BlockSpec(memory_space=pltpu.MemorySpace.SMEM),
            scratch_shapes=[pltpu.SMEM((2,), jnp.float32)],
        ),
        compiler_params=pltpu.CompilerParams(
            dimension_semantics=("arbitrary",)),
        cost_estimate=pl.CostEstimate(
            flops=b_work * (2 * d * d * d + 6 * d * d + 2 * C),
            transcendentals=b_work,
            bytes_accessed=bytes_accessed),
    )(pred, target2d, trans_feat)
    return out.reshape(())


def _reference_loss(pred, target, trans_feat):
    """Pure-JAX reference mirroring the PyTorch forward."""
    nll = -jnp.mean(pred[jnp.arange(pred.shape[0]), target])
    d = trans_feat.shape[1]
    I = jnp.eye(d, dtype=jnp.float32)[None, :, :]
    gram = jnp.einsum('bij,bkj->bik', trans_feat, trans_feat,
                      precision=jax.lax.Precision.HIGHEST)
    mat_diff = jnp.mean(jnp.sqrt(jnp.sum((gram - I) ** 2, axis=(1, 2))))
    return nll + mat_diff * MAT_DIFF_LOSS_SCALE


if __name__ == "__main__":
    key = jax.random.PRNGKey(0)
    k1, k2, k3, k4, k5, k6 = jax.random.split(key, 6)

    # --- small case (single block, block == full batch) ----------------------
    B, C, d = 2, 4, 8
    logits = jax.random.normal(k1, (B, C), dtype=jnp.float32)
    pred = jax.nn.log_softmax(logits, axis=-1)
    target = jax.random.randint(k2, (B,), 0, C, dtype=jnp.int32)
    trans_feat = jax.random.normal(k3, (B, d, d), dtype=jnp.float32)

    loss = pointnet_loss(pred, target, trans_feat)
    jax.block_until_ready(loss)
    ref = _reference_loss(pred, target, trans_feat)
    assert jnp.allclose(loss, ref, rtol=1e-5, atol=1e-5), (loss, ref)

    # --- larger case: default (single block, B not a multiple of 8) ----------
    B2, C2, d2 = 260, 16, 32
    logits2 = jax.random.normal(k4, (B2, C2), dtype=jnp.float32)
    pred2 = jax.nn.log_softmax(logits2, axis=-1)
    target2 = jax.random.randint(k5, (B2,), 0, C2, dtype=jnp.int32)
    trans_feat2 = jax.random.normal(k6, (B2, d2, d2), dtype=jnp.float32)

    loss2 = pointnet_loss(pred2, target2, trans_feat2)
    jax.block_until_ready(loss2)
    ref2 = _reference_loss(pred2, target2, trans_feat2)
    assert jnp.allclose(loss2, ref2, rtol=1e-4, atol=1e-4), (loss2, ref2)

    # --- same data, forced small block -> multi-block grid + ragged-edge mask
    loss3 = pointnet_loss(pred2, target2, trans_feat2, block_b=64)
    jax.block_until_ready(loss3)
    assert jnp.allclose(loss3, ref2, rtol=1e-4, atol=1e-4), (loss3, ref2)

    print("KERNEL_OK")
</pallas_src>

<mosaic_0001>
module attributes {stable_mosaic.version = 11 : i64} {
  func.func @_pointnet_loss_kernel(%arg0: i32, %arg1: memref<2x4xf32, #tpu.memory_space<vmem>>, %arg2: memref<2x1xi32, #tpu.memory_space<vmem>>, %arg3: memref<2x8x8xf32, #tpu.memory_space<vmem>>, %arg4: memref<1x1xf32, #tpu.memory_space<smem>>, %arg5: memref<2xf32, #tpu.memory_space<smem>>) attributes {dimension_semantics = [#tpu.dimension_semantics<arbitrary>], iteration_bounds = array<i64: 1>, scalar_prefetch = 0 : i64, scratch_operands = 1 : i64, tpu.core_type = #tpu.core_type<tc>, window_params = [{transform_indices = @transform_0, window_bounds = array<i64: 2, 4>}, {transform_indices = @transform_1, window_bounds = array<i64: 2, 1>}, {transform_indices = @transform_2, window_bounds = array<i64: 2, 8, 8>}, {transform_indices = @transform_3, window_bounds = array<i64: 1, 1>}]} {
    %c0_i32 = arith.constant 0 : i32
    %0 = arith.cmpi eq, %arg0, %c0_i32 : i32
    %1 = arith.extui %0 : i1 to i32
    %c0_i32_0 = arith.constant 0 : i32
    %2 = arith.cmpi ne, %1, %c0_i32_0 : i32
    scf.if %2 {
      %cst_24 = arith.constant 0.000000e+00 : f32
      %c0_25 = arith.constant 0 : index
      %55 = memref.load %arg5[%c0_25] : memref<2xf32, #tpu.memory_space<smem>>
      memref.store %cst_24, %arg5[%c0_25] : memref<2xf32, #tpu.memory_space<smem>>
      %cst_26 = arith.constant 0.000000e+00 : f32
      %c1_27 = arith.constant 1 : index
      %56 = memref.load %arg5[%c1_27] : memref<2xf32, #tpu.memory_space<smem>>
      memref.store %cst_26, %arg5[%c1_27] : memref<2xf32, #tpu.memory_space<smem>>
    } else {
    }
    %c0 = arith.constant 0 : index
    %c0_1 = arith.constant 0 : index
    %3 = vector.load %arg1[%c0, %c0_1] : memref<2x4xf32, #tpu.memory_space<vmem>>, vector<2x4xf32>
    %c0_2 = arith.constant 0 : index
    %c0_3 = arith.constant 0 : index
    %4 = vector.load %arg2[%c0_2, %c0_3] : memref<2x1xi32, #tpu.memory_space<vmem>>, vector<2x1xi32>
    %5 = tpu.iota {dimensions = array<i32: 0>} : vector<2x1xi32>
    %c2_i32 = arith.constant 2 : i32
    %6 = arith.muli %arg0, %c2_i32 : i32
    %7 = vector.broadcast %6 : i32 to vector<2x1xi32>
    %8 = arith.addi %7, %5 : vector<2x1xi32>
    %c2_i32_4 = arith.constant 2 : i32
    %9 = vector.broadcast %c2_i32_4 : i32 to vector<2x1xi32>
    %10 = arith.cmpi slt, %8, %9 : vector<2x1xi32>
    %11 = tpu.iota {dimensions = array<i32: 1>} : vector<2x4xi32>
    %12 = vector.broadcast %4 : vector<2x1xi32> to vector<2x4xi32>
    %13 = arith.cmpi eq, %11, %12 : vector<2x4xi32>
    %14 = vector.broadcast %10 : vector<2x1xi1> to vector<2x4xi1>
    %15 = arith.andi %13, %14 : vector<2x4xi1>
    %cst = arith.constant 0.000000e+00 : f32
    %16 = vector.broadcast %cst : f32 to vector<2x4xf32>
    %17 = arith.select %15, %3, %16 : vector<2x4xi1>, vector<2x4xf32>
    %18 = vector.shape_cast %17 : vector<2x4xf32> to vector<1x2x4xf32>
    %cst_5 = arith.constant dense<0.000000e+00> : vector<1xf32>
    %19 = vector.multi_reduction <add>, %18, %cst_5 [1, 2] : vector<1x2x4xf32> to vector<1xf32>
    %20 = vector.shape_cast %19 : vector<1xf32> to vector<1x1x1xf32>
    %21 = vector.extract %20[0, 0, 0] : f32 from vector<1x1x1xf32>
    %c0_6 = arith.constant 0 : index
    %c0_7 = arith.constant 0 : index
    %c0_8 = arith.constant 0 : index
    %22 = vector.load %arg3[%c0_6, %c0_7, %c0_8] : memref<2x8x8xf32, #tpu.memory_space<vmem>>, vector<2x8x8xf32>
    "tpu.trace_start"() <{level = 10 : i32, message = "bij,bkj->bik"}> : () -> ()
    %cst_9 = arith.constant dense<0.000000e+00> : vector<2x8x8xf32>
    %23 = tpu.matmul %22, %22, %cst_9 {dimension_numbers = #tpu.dot_dimension_numbers<[2], [2], [1], [1], [0, 0, 0, 1, 1, 1], [0], [0]>} : vector<2x8x8xf32>, vector<2x8x8xf32>, vector<2x8x8xf32> -> vector<2x8x8xf32>
    "tpu.trace_stop"() : () -> ()
    %24 = arith.mulf %23, %23 : vector<2x8x8xf32>
    %cst_10 = arith.constant dense<0.000000e+00> : vector<2x8xf32>
    %25 = vector.multi_reduction <add>, %24, %cst_10 [2] : vector<2x8x8xf32> to vector<2x8xf32>
    %cst_11 = arith.constant dense<0.000000e+00> : vector<2xf32>
    %26 = vector.multi_reduction <add>, %25, %cst_11 [1] : vector<2x8xf32> to vector<2xf32>
    %27 = vector.shape_cast %26 : vector<2xf32> to vector<2x1xf32>
    %28 = arith.mulf %22, %22 : vector<2x8x8xf32>
    %cst_12 = arith.constant dense<0.000000e+00> : vector<2x8xf32>
    %29 = vector.multi_reduction <add>, %28, %cst_12 [2] : vector<2x8x8xf32> to vector<2x8xf32>
    %cst_13 = arith.constant dense<0.000000e+00> : vector<2xf32>
    %30 = vector.multi_reduction <add>, %29, %cst_13 [1] : vector<2x8xf32> to vector<2xf32>
    %31 = vector.shape_cast %30 : vector<2xf32> to vector<2x1xf32>
    %cst_14 = arith.constant 2.000000e+00 : f32
    %32 = vector.broadcast %cst_14 : f32 to vector<2x1xf32>
    %33 = arith.mulf %32, %31 : vector<2x1xf32>
    %34 = arith.subf %27, %33 : vector<2x1xf32>
    %cst_15 = arith.constant 8.000000e+00 : f32
    %35 = vector.broadcast %cst_15 : f32 to vector<2x1xf32>
    %36 = arith.addf %34, %35 : vector<2x1xf32>
    %cst_16 = arith.constant 0.000000e+00 : f32
    %37 = vector.broadcast %cst_16 : f32 to vector<2x1xf32>
    %38 = arith.maximumf %36, %37 : vector<2x1xf32>
    %39 = math.sqrt %38 : vector<2x1xf32>
    %cst_17 = arith.constant 0.000000e+00 : f32
    %40 = vector.broadcast %cst_17 : f32 to vector<2x1xf32>
    %41 = arith.select %10, %39, %40 : vector<2x1xi1>, vector<2x1xf32>
    %42 = vector.shape_cast %41 : vector<2x1xf32> to vector<1x2x1xf32>
    %cst_18 = arith.constant dense<0.000000e+00> : vector<1xf32>
    %43 = vector.multi_reduction <add>, %42, %cst_18 [1, 2] : vector<1x2x1xf32> to vector<1xf32>
    %44 = vector.shape_cast %43 : vector<1xf32> to vector<1x1x1xf32>
    %45 = vector.extract %44[0, 0, 0] : f32 from vector<1x1x1xf32>
    %c0_19 = arith.constant 0 : index
    %46 = memref.load %arg5[%c0_19] : memref<2xf32, #tpu.memory_space<smem>>
    %47 = arith.addf %46, %21 : f32
    %c0_20 = arith.constant 0 : index
    %48 = memref.load %arg5[%c0_20] : memref<2xf32, #tpu.memory_space<smem>>
    memref.store %47, %arg5[%c0_20] : memref<2xf32, #tpu.memory_space<smem>>
    %c1 = arith.constant 1 : index
    %49 = memref.load %arg5[%c1] : memref<2xf32, #tpu.memory_space<smem>>
    %50 = arith.addf %49, %45 : f32
    %c1_21 = arith.constant 1 : index
    %51 = memref.load %arg5[%c1_21] : memref<2xf32, #tpu.memory_space<smem>>
    memref.store %50, %arg5[%c1_21] : memref<2xf32, #tpu.memory_space<smem>>
    %c0_i32_22 = arith.constant 0 : i32
    %52 = arith.cmpi eq, %arg0, %c0_i32_22 : i32
    %53 = arith.extui %52 : i1 to i32
    %c0_i32_23 = arith.constant 0 : i32
    %54 = arith.cmpi ne, %53, %c0_i32_23 : i32
    scf.if %54 {
      %c1_24 = arith.constant 1 : index
      %55 = memref.load %arg5[%c1_24] : memref<2xf32, #tpu.memory_space<smem>>
      %cst_25 = arith.constant 1.000000e-03 : f32
      %56 = arith.mulf %cst_25, %55 : f32
      %c0_26 = arith.constant 0 : index
      %57 = memref.load %arg5[%c0_26] : memref<2xf32, #tpu.memory_space<smem>>
      %58 = arith.subf %56, %57 : f32
      %cst_27 = arith.constant 5.000000e-01 : f32
      %59 = arith.mulf %58, %cst_27 : f32
      %c0_28 = arith.constant 0 : index
      %c0_29 = arith.constant 0 : index
      %60 = memref.load %arg4[%c0_28, %c0_29] : memref<1x1xf32, #tpu.memory_space<smem>>
      memref.store %59, %arg4[%c0_28, %c0_29] : memref<1x1xf32, #tpu.memory_space<smem>>
    } else {
    }
    return
  }
  func.func @transform_0(%arg0: i32) -> (i32, i32) {
    %c0_i32 = arith.constant 0 : i32
    %c0_i32_0 = arith.constant 0 : i32
    return %arg0, %c0_i32 : i32, i32
  }
  func.func @transform_1(%arg0: i32) -> (i32, i32) {
    %c0_i32 = arith.constant 0 : i32
    %c0_i32_0 = arith.constant 0 : i32
    return %arg0, %c0_i32 : i32, i32
  }
  func.func @transform_2(%arg0: i32) -> (i32, i32, i32) {
    %c0_i32 = arith.constant 0 : i32
    %c0_i32_0 = arith.constant 0 : i32
    %c0_i32_1 = arith.constant 0 : i32
    return %arg0, %c0_i32, %c0_i32_0 : i32, i32, i32
  }
  func.func @transform_3(%arg0: i32) -> (i32, i32) {
    %c0_i32 = arith.constant 0 : i32
    %c0_i32_0 = arith.constant 0 : i32
    %c0_i32_1 = arith.constant 0 : i32
    return %c0_i32, %c0_i32_0 : i32, i32
  }
}

</mosaic_0001>

<llo_original>
// kernel: tpu_custom_call.1
$region0: #{tpu_custom_call.1}
  #allocation0 [shape = 'u32[]', space=smem, size = 0x4, offset = 0x4, fixed_abs, tag = 'smem constant byte address 0x4 - core index']
  #allocation1 [shape = 'u32[144,128]{1,0:T(1,128)}', space=vmem, size = 0x12000, scoped, tag = 'internal scratch']
  #allocation2 [shape = 'f32[2]{0:T(128)}', space=smem, size = 0x200, scoped, tag = 'scratch operand']
  %s0 = inlined_call_operand.vmem [shape: f32[2,4], index: 0, kind: input, shape index: {}]
  %s1 = inlined_call_operand.vmem [shape: s32[2,1], index: 1, kind: input, shape index: {}]
  %s2 = inlined_call_operand.hbm [shape: f32[2,8,8], index: 2, kind: input, shape index: {}]
  %s3 = inlined_call_operand.hbm [shape: f32[1,1], index: 3, kind: output, shape index: {}]
  %s4 = sld [smem:[#allocation0]]
  $region34: #{tpu_custom_call.1} parent=0
    _
  %s6 = ssub.s32 1, %s4
  %s7 = scalar_select 0, %s6, %s4
  $region1: #{tpu_custom_call.1} parent=0
    #allocation3 [shape = 'u8[8192]{0}', space=vmem, size = 0x2000, scoped, tag = 'input window, operand 2, single buffered']
    #allocation4 [shape = 's32[1]{0}', space=sflag, size = 0x4, scoped, tag = 'scoped memory for tpu_custom_call.1']
    #allocation5 [shape = 's32[1]{0}', space=sflag, size = 0x4, scoped, tag = 'scoped memory for tpu_custom_call.1']
    #allocation6 [shape = 'u8[512]{0}', space=smem, size = 0x200, scoped, tag = 'output window, operand 0, single buffered']
    %8 = vsyncpa [#allocation4], 0
    %9 = vsyncpa [#allocation5], 0
    // Predicated region
    $region2: #{tpu_custom_call.1} parent=1 // pred_check
      _
    $region3: #{tpu_custom_call.1} parent=1 // pred_check_branch
      %11 = sbr.rel (0) target = $region5
    $region4: #{tpu_custom_call.1} parent=1 // pred_region
      _
    $region5: #{tpu_custom_call.1} parent=1 // pred_fallthru
      _
    // Predicated region
    $region6: #{tpu_custom_call.1} parent=1 // pred_check
      _
    $region7: #{tpu_custom_call.1} parent=1 // pred_check_branch
      %13 = sbr.rel (0) target = $region9
    $region8: #{tpu_custom_call.1} parent=1 // pred_region
      _
    $region9: #{tpu_custom_call.1} parent=1 // pred_fallthru
      _
    // Predicated region
    $region10: #{tpu_custom_call.1} parent=1 // pred_check
      _
    $region11: #{tpu_custom_call.1} parent=1 // pred_check_branch
      %15 = sbr.rel (0) target = $region13
    $region12: #{tpu_custom_call.1} parent=1 // pred_region
      %s17 = ssub.s32 256, 256
      %18 = vsyncadd [#allocation4], %s17
      %s19 = sshll.u32 [#allocation3], 4
      %s20 = int_to_ptr.vmem [resolvable:$true] %s19
      %25 = dma.hbm_to_vmem [thread:$0]  %s2, 256, %s20, [#allocation4], 128, 128, 8
    $region13: #{tpu_custom_call.1} parent=1 // pred_fallthru
      _
    // Predicated region
    $region14: #{tpu_custom_call.1} parent=1 // pred_check
      _
    $region15: #{tpu_custom_call.1} parent=1 // pred_check_branch
      %27 = sbr.rel (0) target = $region17
    $region16: #{tpu_custom_call.1} parent=1 // pred_region
      %28 = dma.done [#allocation4], 256
    $region17: #{tpu_custom_call.1} parent=1 // pred_fallthru
      _
    %p29 = scmp.eq.s32.totalorder 0, 0
    // Predicated region
    $region18: #{tpu_custom_call.1} parent=1 // pred_check
      %p30 = pneg %p29
    $region19: #{tpu_custom_call.1} parent=1 // pred_check_branch
      %32 = sbr.rel (%p30) target = $region21
    $region20: #{tpu_custom_call.1} parent=1 // pred_region
      %s33 = scalar_lea.smem [#allocation2], 0
      %34 = sst [smem:[%s33]] 0.0
      %s35 = scalar_lea.smem [#allocation2], 1
      %36 = sst [smem:[%s35]] 0.0
    $region21: #{tpu_custom_call.1} parent=1 // pred_fallthru
      _
    %v37 = vld [vmem:[%s0] sm:$0x3]
    %v38 = vld [vmem:[%s1] sm:$0x3]
    %v39 = vlaneseq
    %v40 = vshrl.u32 %v39, 7
    %s41 = smul.u32 0, 2
    %v42 = vstv %s41
    %v43 = vadd.s32 %v42, %v40
    %vm44 = vcmp.lt.s32.totalorder %v43, 2
    %v45 = vlaneseq
    %v46 = vand.u32 %v45, 127
    %47 = vset.pattern.permute.xlu0 0
    %48 = vperm.xlu0 %47, %v38
    %v49 = vpop.permute.xlu0 %48
    %vm50 = vcmp.eq.s32.totalorder %v46, %v49
    %v51 = vsel %vm44, 1, 0
    %vm52 = vcmp.eq.s32.totalorder %v51, 1
    %vm53 = vmand %vm50, %vm52
    %v54 = vsel %vm53, %v37, 0.0
    %vm55 = vcmask 25600
    %v56 = vsel %vm55, %v54, 0.0
    %57 = vadd.xlane.f32.xlu0 %v56
    %v58 = vpop.xlane.xlu0 %57
    %v59 = vrot.slane %v58, 4
    %v60 = vadd.f32 %v58, %v59
    %v61 = vrot.slane %v60, 2
    %v62 = vadd.f32 %v60, %v61
    %v63 = vrot.slane %v62, 1
    %v64 = vadd.f32 %v62, %v63
    %s65 = vtos %v64
    %v66 = vld [vmem:[#allocation3] sm:$0xff]
    %v67 = vld [vmem:[#allocation3 + $0x8] sm:$0xff]
    %vm68 = vcmask 64512
    %v70 = vsel %vm68, %v66, 0
    %72 = vmatprep.subr.mxu0 0.0
    %73 = vmatpush1.xpose.msra.mxu0 %v70
    %74 = vmatprep.subr.mxu0 0.0
    %75 = vmatpush1.xpose.msra.mxu0 0.0
    %76 = vmatprep.subr.mxu0 0.0
    %77 = vmatpush1.xpose.msra.mxu0 0.0
    %78 = vmatprep.subr.mxu0 0.0
    %79 = vmatpush1.xpose.msra.mxu0 0.0
    %80 = vmatprep.subr.mxu0 0.0
    %81 = vmatpush1.xpose.msra.mxu0 0.0
    %82 = vmatprep.subr.mxu0 0.0
    %83 = vmatpush1.xpose.msra.mxu0 0.0
    %84 = vmatprep.subr.mxu0 0.0
    %85 = vmatpush1.xpose.msra.mxu0 0.0
    %86 = vmatprep.subr.mxu0 0.0
    %87 = vmatpush1.xpose.msra.mxu0 0.0
    %88 = vmatprep.subr.mxu0 0.0
    %89 = vmatpush1.xpose.msra.mxu0 0.0
    %90 = vmatprep.subr.mxu0 0.0
    %91 = vmatpush1.xpose.msra.mxu0 0.0
    %92 = vmatprep.subr.mxu0 0.0
    %93 = vmatpush1.xpose.msra.mxu0 0.0
    %94 = vmatprep.subr.mxu0 0.0
    %95 = vmatpush1.xpose.msra.mxu0 0.0
    %96 = vmatprep.subr.mxu0 0.0
    %97 = vmatpush1.xpose.msra.mxu0 0.0
    %98 = vmatprep.subr.mxu0 0.0
    %99 = vmatpush1.xpose.msra.mxu0 0.0
    %100 = vmatprep.subr.mxu0 0.0
    %101 = vmatpush1.xpose.msra.mxu0 0.0
    %102 = vmatprep.subr.mxu0 0.0
    %103 = vmatpush1.xpose.msra.mxu0 0.0
    %104 = vmatprep.subr.mxu0 0.0
    %105 = vmatpush1.xpose.msra.mxu0 0.0
    %106 = vmatprep.subr.mxu0 0.0
    %107 = vmatpush1.xpose.msra.mxu0 0.0
    %108 = vmatprep.subr.mxu0 0.0
    %109 = vmatpush1.xpose.msra.mxu0 0.0
    %110 = vmatprep.subr.mxu0 0.0
    %111 = vmatpush1.xpose.msra.mxu0 0.0
    %112 = vmatprep.subr.mxu0 0.0
    %113 = vmatpush1.xpose.msra.mxu0 0.0
    %114 = vmatprep.subr.mxu0 0.0
    %115 = vmatpush1.xpose.msra.mxu0 0.0
    %116 = vmatprep.subr.mxu0 0.0
    %117 = vmatpush1.xpose.msra.mxu0 0.0
    %118 = vmatprep.subr.mxu0 0.0
    %119 = vmatpush1.xpose.msra.mxu0 0.0
    %120 = vmatprep.subr.mxu0 0.0
    %121 = vmatpush1.xpose.msra.mxu0 0.0
    %122 = vmatprep.subr.mxu0 0.0
    %123 = vmatpush1.xpose.msra.mxu0 0.0
    %124 = vmatprep.subr.mxu0 0.0
    %125 = vmatpush1.xpose.msra.mxu0 0.0
    %126 = vmatprep.subr.mxu0 0.0
    %127 = vmatpush1.xpose.msra.mxu0 0.0
    %128 = vmatprep.subr.mxu0 0.0
    %129 = vmatpush1.xpose.msra.mxu0 0.0
    %130 = vmatprep.subr.mxu0 0.0
    %131 = vmatpush1.xpose.msra.mxu0 0.0
    %132 = vmatprep.subr.mxu0 0.0
    %133 = vmatpush1.xpose.msra.mxu0 0.0
    %134 = vmatprep.subr.mxu0 0.0
    %135 = vmatpush1.xpose.msra.mxu0 0.0
    %136 = vmatprep.mubr.f32.mxu0 0.0
    %137 = vmatmul.mubr.f32.gmra.mrb[0].mxu0 %v70
    %v138 = vpop.f32.mrb[0].mxu0
    %v139 = vadd.f32 0.0, %v138
    %v140 = vpop.f32.mrb[0].mxu0
    %141 = vdwg.mxu0
    %v143 = vsel %vm68, %v67, 0
    %145 = vmatprep.subr.mxu0 0.0
    %146 = vmatpush1.xpose.msra.mxu0 %v143
    %147 = vmatprep.subr.mxu0 0.0
    %148 = vmatpush1.xpose.msra.mxu0 0.0
    %149 = vmatprep.subr.mxu0 0.0
    %150 = vmatpush1.xpose.msra.mxu0 0.0
    %151 = vmatprep.subr.mxu0 0.0
    %152 = vmatpush1.xpose.msra.mxu0 0.0
    %153 = vmatprep.subr.mxu0 0.0
    %154 = vmatpush1.xpose.msra.mxu0 0.0
    %155 = vmatprep.subr.mxu0 0.0
    %156 = vmatpush1.xpose.msra.mxu0 0.0
    %157 = vmatprep.subr.mxu0 0.0
    %158 = vmatpush1.xpose.msra.mxu0 0.0
    %159 = vmatprep.subr.mxu0 0.0
    %160 = vmatpush1.xpose.msra.mxu0 0.0
    %161 = vmatprep.subr.mxu0 0.0
    %162 = vmatpush1.xpose.msra.mxu0 0.0
    %163 = vmatprep.subr.mxu0 0.0
    %164 = vmatpush1.xpose.msra.mxu0 0.0
    %165 = vmatprep.subr.mxu0 0.0
    %166 = vmatpush1.xpose.msra.mxu0 0.0
    %167 = vmatprep.subr.mxu0 0.0
    %168 = vmatpush1.xpose.msra.mxu0 0.0
    %169 = vmatprep.subr.mxu0 0.0
    %170 = vmatpush1.xpose.msra.mxu0 0.0
    %171 = vmatprep.subr.mxu0 0.0
    %172 = vmatpush1.xpose.msra.mxu0 0.0
    %173 = vmatprep.subr.mxu0 0.0
    %174 = vmatpush1.xpose.msra.mxu0 0.0
    %175 = vmatprep.subr.mxu0 0.0
    %176 = vmatpush1.xpose.msra.mxu0 0.0
    %177 = vmatprep.subr.mxu0 0.0
    %178 = vmatpush1.xpose.msra.mxu0 0.0
    %179 = vmatprep.subr.mxu0 0.0
    %180 = vmatpush1.xpose.msra.mxu0 0.0
    %181 = vmatprep.subr.mxu0 0.0
    %182 = vmatpush1.xpose.msra.mxu0 0.0
    %183 = vmatprep.subr.mxu0 0.0
    %184 = vmatpush1.xpose.msra.mxu0 0.0
    %185 = vmatprep.subr.mxu0 0.0
    %186 = vmatpush1.xpose.msra.mxu0 0.0
    %187 = vmatprep.subr.mxu0 0.0
    %188 = vmatpush1.xpose.msra.mxu0 0.0
    %189 = vmatprep.subr.mxu0 0.0
    %190 = vmatpush1.xpose.msra.mxu0 0.0
    %191 = vmatprep.subr.mxu0 0.0
    %192 = vmatpush1.xpose.msra.mxu0 0.0
    %193 = vmatprep.subr.mxu0 0.0
    %194 = vmatpush1.xpose.msra.mxu0 0.0
    %195 = vmatprep.subr.mxu0 0.0
    %196 = vmatpush1.xpose.msra.mxu0 0.0
    %197 = vmatprep.subr.mxu0 0.0
    %198 = vmatpush1.xpose.msra.mxu0 0.0
    %199 = vmatprep.subr.mxu0 0.0
    %200 = vmatpush1.xpose.msra.mxu0 0.0
    %201 = vmatprep.subr.mxu0 0.0
    %202 = vmatpush1.xpose.msra.mxu0 0.0
    %203 = vmatprep.subr.mxu0 0.0
    %204 = vmatpush1.xpose.msra.mxu0 0.0
    %205 = vmatprep.subr.mxu0 0.0
    %206 = vmatpush1.xpose.msra.mxu0 0.0
    %207 = vmatprep.subr.mxu0 0.0
    %208 = vmatpush1.xpose.msra.mxu0 0.0
    %209 = vmatprep.mubr.f32.mxu0 0.0
    %210 = vmatmul.mubr.f32.gmra.mrb[0].mxu0 %v143
    %v211 = vpop.f32.mrb[0].mxu0
    %v212 = vadd.f32 0.0, %v211
    %v213 = vpop.f32.mrb[0].mxu0
    %214 = vdwg.mxu0
    %v215 = vmul.f32 %v139, %v139
    %v216 = vmul.f32 %v212, %v212
    %v217 = vsel %vm68, %v215, 0.0
    %218 = vadd.xlane.f32.xlu0 %v217
    %v219 = vpop.xlane.xlu0 %218
    %v220 = vsel %vm68, %v216, 0.0
    %221 = vadd.xlane.f32.xlu0 %v220
    %v222 = vpop.xlane.xlu0 %221
    %v225 = vlaneseq
    %v226 = vshrl.u32 %v225, 7
    %v227 = vsub.s32 %v46, %v226
    %v228 = vrot.slane %v219, %v227
    %v229 = vlaneseq
    %v230 = vshrl.u32 %v229, 7
    %v231 = vsub.s32 %v46, %v230
    %v232 = vrot.slane %v222, %v231
    %vm233 = vcmask 1041409
    %v234 = vsel %vm233, %v232, %v228
    %vm236 = vcmask 58368
    %v237 = vsel %vm236, %v234, 0.0
    %238 = vadd.xlane.f32.xlu0 %v237
    %v239 = vpop.xlane.xlu0 %238
    %v240 = vmul.f32 %v66, %v66
    %v241 = vmul.f32 %v67, %v67
    %v242 = vsel %vm68, %v240, 0.0
    %243 = vadd.xlane.f32.xlu0 %v242
    %v244 = vpop.xlane.xlu0 %243
    %v245 = vsel %vm68, %v241, 0.0
    %246 = vadd.xlane.f32.xlu0 %v245
    %v247 = vpop.xlane.xlu0 %246
    %v250 = vlaneseq
    %v251 = vshrl.u32 %v250, 7
    %v252 = vsub.s32 %v46, %v251
    %v253 = vrot.slane %v244, %v252
    %v254 = vlaneseq
    %v255 = vshrl.u32 %v254, 7
    %v256 = vsub.s32 %v46, %v255
    %v257 = vrot.slane %v247, %v256
    %v258 = vsel %vm233, %v257, %v253
    %v260 = vsel %vm236, %v258, 0.0
    %261 = vadd.xlane.f32.xlu0 %v260
    %v262 = vpop.xlane.xlu0 %261
    %v263 = vmul.f32 %v262, 2.0
    %v264 = vsub.f32 %v239, %v263
    %v265 = vadd.f32 %v264, 8.0
    %v266 = vmax.f32 %v265, 0.0
    %v267 = vrsqrt.pop %v266
    %v268 = vmul.f32 %v266, %v267
    %vm269 = vcmp.eq.f32.partialorder %v266, inf
    %v270 = vsel %vm269, %v266, %v268
    %vm271 = vcmp.eq.f32.partialorder %v266, 0.0
    %v272 = vand.u32 %v266, 2147483648
    %v273 = vsel %vm271, %v272, %v270
    %v274 = vsel %vm44, %v273, 0.0
    %vm275 = vcmask 1024
    %v276 = vsel %vm275, %v274, 0.0
    %277 = vadd.xlane.f32.xlu0 %v276
    %v278 = vpop.xlane.xlu0 %277
    %v279 = vrot.slane %v278, 4
    %v280 = vadd.f32 %v278, %v279
    %v281 = vrot.slane %v280, 2
    %v282 = vadd.f32 %v280, %v281
    %v283 = vrot.slane %v282, 1
    %v284 = vadd.f32 %v282, %v283
    %s285 = vtos %v284
    %s286 = sld [smem:[#allocation2]]
    %s287 = sadd.f32 %s286, %s65
    %s288 = scalar_lea.smem [#allocation2], 0
    %289 = sst [smem:[%s288]] %s287
    %s290 = sld [smem:[#allocation2 + $0x1]]
    %s291 = sadd.f32 %s290, %s285
    %s292 = scalar_lea.smem [#allocation2], 1
    %293 = sst [smem:[%s292]] %s291
    // Predicated region
    $region22: #{tpu_custom_call.1} parent=1 // pred_check
      %p294 = pneg %p29
    $region23: #{tpu_custom_call.1} parent=1 // pred_check_branch
      %296 = sbr.rel (%p294) target = $region25
    $region24: #{tpu_custom_call.1} parent=1 // pred_region
      %s297 = sld [smem:[#allocation2 + $0x1]]
      %s298 = smul.f32 %s297, 0.001
      %s299 = sld [smem:[#allocation2]]
      %s300 = ssub.f32 %s298, %s299
      %s301 = smul.f32 %s300, 0.5
      %s302 = scalar_lea.smem [#allocation6], 0
      %303 = sst [smem:[%s302]] %s301
    $region25: #{tpu_custom_call.1} parent=1 // pred_fallthru
      _
    // Predicated region
    $region26: #{tpu_custom_call.1} parent=1 // pred_check
      _
    $region27: #{tpu_custom_call.1} parent=1 // pred_check_branch
      %305 = sbr.rel (0) target = $region29
    $region28: #{tpu_custom_call.1} parent=1 // pred_region
      %s307 = ssub.s32 16, 16
      %308 = vsyncadd [#allocation5], %s307
      %311 = dma.smem_to_hbm [#allocation6], 16, %s3, [#allocation5]
    $region29: #{tpu_custom_call.1} parent=1 // pred_fallthru
      _
    // Predicated region
    $region30: #{tpu_custom_call.1} parent=1 // pred_check
      _
    $region31: #{tpu_custom_call.1} parent=1 // pred_check_branch
      %313 = sbr.rel (0) target = $region33
    $region32: #{tpu_custom_call.1} parent=1 // pred_region
      %314 = dma.done [#allocation5], 16
    $region33: #{tpu_custom_call.1} parent=1 // pred_fallthru
      _
    %315 = sfence
    %316 = vsyncpa [#allocation4], 1
    %317 = vsyncpa [#allocation5], 1

</llo_original>
